<compile_context>
chip_gen: v5e
topology: v5e:2x2
jax: 0.10.0
libtpu: 0.0.40
codegen_flags: <defaults>
</compile_context>

<pallas_src>
import math
import functools

import jax
import jax.numpy as jnp
from jax import lax
from jax.experimental import pallas as pl
from jax.experimental.pallas import tpu as pltpu


# ----------------------------- helpers ---------------------------------------


def _round_up(x, m):
    return (x + m - 1) // m * m


def _choose_tile(s_pad):
    """Sequence tile: 256/128 for aligned sequences, else the full extent."""
    for t in (256, 128):
        if s_pad >= t and s_pad % t == 0:
            return t
    return s_pad


def _choose_head_block(n_heads, d_k, tq, s_pad, budget_bytes=8 * 1024 * 1024):
    """Largest divisor of H whose fused width (Hb*d_k) fills the MXU better while
    keeping the (Hb, tq, S) score block + K/V blocks within a VMEM budget."""
    best = 1
    for cand in range(1, n_heads + 1):
        if n_heads % cand:
            continue
        if cand * d_k > 256:
            continue
        score_block = cand * tq * s_pad * 4        # f32 score output block
        kv_block = 2 * cand * s_pad * d_k * 2      # bf16 K + V blocks
        if 2 * (score_block + kv_block) > budget_bytes:   # double-buffered
            continue
        best = cand
    return best


def _vmem_limit_bytes():
    """~3/4 of physical VMEM, capped at 100 MiB: ~96 MiB on v5e/v6e, ~48 MiB on v7x."""
    try:
        cap = getattr(pltpu.get_tpu_info(), "vmem_capacity_bytes", 128 * 1024 * 1024)
    except Exception:
        cap = 128 * 1024 * 1024
    return int(max(32 * 1024 * 1024, min(cap * 3 // 4, 100 * 1024 * 1024)))


# ----------------------------- kernels ----------------------------------------


def _qkv_kernel(x_ref, wq_ref, bq_ref, wk_ref, bk_ref, wv_ref, bv_ref,
                q_ref, k_ref, v_ref, *, scale):
    """One grid step = (sequence tile, head): project Q (pre-scaled), K, V once."""
    x = x_ref[...]                                                     # (ts, D) bf16
    q = jnp.dot(x, wq_ref[0], preferred_element_type=jnp.float32) + bq_ref[0]
    q_ref[0] = (q * scale).astype(q_ref.dtype)                         # fold 1/sqrt(d_k)
    k = jnp.dot(x, wk_ref[0], preferred_element_type=jnp.float32) + bk_ref[0]
    k_ref[0] = k.astype(k_ref.dtype)
    v = jnp.dot(x, wv_ref[0], preferred_element_type=jnp.float32) + bv_ref[0]
    v_ref[0] = v.astype(v_ref.dtype)


def _attn_kernel(q_ref, k_ref, v_ref, wp_ref, bp_ref, out_ref, score_ref,
                 *, heads_per_block, n_valid, s_pad):
    """One grid step = (query tile i ["parallel"], head block hb ["arbitrary"])."""
    q = q_ref[...]                       # (Hb, tq, d_k)    bf16, scale pre-folded
    k = k_ref[...]                       # (Hb, S_pad, d_k) bf16
    v = v_ref[...]                       # (Hb, S_pad, d_k) bf16

    # score = q @ k^T, contracting last dims -> no materialized transpose (XLU).
    s = jnp.einsum('hqd,hkd->hqk', q, k,
                   preferred_element_type=jnp.float32)                 # (Hb, tq, S_pad)
    score_ref[...] = s                   # pre-softmax, already scaled, f32

    if n_valid != s_pad:                 # static branch: mask padded key columns
        col = lax.broadcasted_iota(jnp.int32, s.shape, 2)
        s = jnp.where(col < n_valid, s, -jnp.inf)

    # Numerically stable softmax in f32; exact reciprocal on the tiny denominator.
    m = jnp.max(s, axis=-1, keepdims=True)
    e = jnp.exp(s - m)
    denom = jnp.sum(e, axis=-1, keepdims=True)
    p = (e * (1.0 / denom)).astype(v.dtype)                            # bf16 for MXU

    ctx = jnp.einsum('hqk,hkd->hqd', p, v,
                     preferred_element_type=jnp.float32)               # (Hb, tq, d_k)
    ctx = ctx.astype(wp_ref.dtype)

    # Block-row decomposition of Wp: concat_h(ctx_h) @ Wp == sum_h ctx_h @ Wp_h.
    contrib = jnp.dot(ctx[0], wp_ref[0], preferred_element_type=jnp.float32)
    for h in range(1, heads_per_block):
        contrib += jnp.dot(ctx[h], wp_ref[h], preferred_element_type=jnp.float32)

    # Resident f32 output block accumulates over the trailing head-block axis:
    # init to the bias once, then a single unconditional accumulate.
    @pl.when(pl.program_id(1) == 0)
    def _():
        out_ref[...] = jnp.broadcast_to(bp_ref[...], out_ref.shape)

    out_ref[...] += contrib


# ----------------------------- wrappers ----------------------------------------


def prepare_params(params, n_heads):
    """One-time repack of (in_features, out_features)-layout linears into a
    per-head, MXU-ready (bf16 weights / f32 biases) layout."""
    wq, bq, wk, bk, wv, bv, wp, bp = params
    D = wq.shape[0]
    d_k = D // n_heads

    def per_head_cols(w):    # (D, D) -> (H, D, d_k): head h's output columns
        return jnp.transpose(w.reshape(D, n_heads, d_k), (1, 0, 2)).astype(jnp.bfloat16)

    def per_head_bias(b):    # (D,) -> (H, 1, d_k)
        return b.reshape(n_heads, 1, d_k).astype(jnp.float32)

    return dict(
        wq=per_head_cols(wq), bq=per_head_bias(bq),
        wk=per_head_cols(wk), bk=per_head_bias(bk),
        wv=per_head_cols(wv), bv=per_head_bias(bv),
        wp=wp.reshape(n_heads, d_k, D).astype(jnp.bfloat16),   # Wp block-rows
        bp=bp.reshape(1, D).astype(jnp.float32),
    )


def weight1d_mha_pallas(x1d, prepared, n_heads):
    S, D = x1d.shape
    d_k = D // n_heads
    scale = 1.0 / math.sqrt(d_k)

    # Sequence handling: <=128 or 128-aligned runs unpadded; larger unaligned S is
    # padded to a 128 multiple (lane-dense score stores) with key-column masking.
    if S % 128 == 0 or S <= 128:
        s_pad = S
    else:
        s_pad = _round_up(S, 128)

    ts = _choose_tile(s_pad)                       # sequence / query tile
    hb = _choose_head_block(n_heads, d_k, ts, s_pad)
    n_hb = n_heads // hb
    n_s = s_pad // ts
    vmem_limit = _vmem_limit_bytes()

    x_bf = x1d.astype(jnp.bfloat16)
    if s_pad != S:
        x_bf = jnp.pad(x_bf, ((0, s_pad - S), (0, 0)))

    # ---- Kernel 1: per-head Q/K/V projection, computed exactly once. ----------
    head_w = lambda i, h: (h, 0, 0)
    qkv_spec = pl.BlockSpec((1, ts, d_k), lambda i, h: (h, i, 0))
    q_all, k_all, v_all = pl.pallas_call(
        functools.partial(_qkv_kernel, scale=scale),
        grid=(n_s, n_heads),
        in_specs=[
            pl.BlockSpec((ts, D), lambda i, h: (i, 0)),      # x tile (constant over h)
            pl.BlockSpec((1, D, d_k), head_w),               # Wq, head h
            pl.BlockSpec((1, 1, d_k), head_w),               # bq
            pl.BlockSpec((1, D, d_k), head_w),               # Wk
            pl.BlockSpec((1, 1, d_k), head_w),               # bk
            pl.BlockSpec((1, D, d_k), head_w),               # Wv
            pl.BlockSpec((1, 1, d_k), head_w),               # bv
        ],
        out_specs=(qkv_spec, qkv_spec, qkv_spec),
        out_shape=(jax.ShapeDtypeStruct((n_heads, s_pad, d_k), jnp.bfloat16),) * 3,
        compiler_params=pltpu.CompilerParams(
            dimension_semantics=("parallel", "parallel"),
            vmem_limit_bytes=vmem_limit),
    )(x_bf, prepared['wq'], prepared['bq'], prepared['wk'], prepared['bk'],
      prepared['wv'], prepared['bv'])

    # ---- Kernel 2: attention + head-blocked output projection. ----------------
    out, score = pl.pallas_call(
        functools.partial(_attn_kernel, heads_per_block=hb,
                          n_valid=S, s_pad=s_pad),
        grid=(n_s, n_hb),
        in_specs=[
            pl.BlockSpec((hb, ts, d_k), lambda i, h: (h, i, 0)),      # Q tile
            pl.BlockSpec((hb, s_pad, d_k), lambda i, h: (h, 0, 0)),   # K (full seq)
            pl.BlockSpec((hb, s_pad, d_k), lambda i, h: (h, 0, 0)),   # V (full seq)
            pl.BlockSpec((hb, d_k, D), lambda i, h: (h, 0, 0)),       # Wp block-rows
            pl.BlockSpec((1, D), lambda i, h: (0, 0)),                # bp
        ],
        out_specs=(
            pl.BlockSpec((ts, D), lambda i, h: (i, 0)),               # out (acc over h)
            pl.BlockSpec((hb, ts, s_pad), lambda i, h: (h, i, 0)),    # pre-softmax score
        ),
        out_shape=(jax.ShapeDtypeStruct((s_pad, D), jnp.float32),
                   jax.ShapeDtypeStruct((n_heads, s_pad, s_pad), jnp.float32)),
        compiler_params=pltpu.CompilerParams(
            dimension_semantics=("parallel", "arbitrary"),
            vmem_limit_bytes=vmem_limit),
    )(q_all, k_all, v_all, prepared['wp'], prepared['bp'])

    if s_pad != S:
        out = out[:S]
        score = score[:, :S, :S]
    return out, score


def weight1d_mha_forward(x1d, prepared, n_heads, attn2d=None):
    out, score = weight1d_mha_pallas(x1d, prepared, n_heads)
    if attn2d is None:
        return out, score
    # Concatenation of previously accumulated attention maps is pure glue.
    return out, jnp.concatenate([attn2d, score], axis=0)


# ----------------------------- reference & demo --------------------------------


def _init_params(key, n_input):
    """Deterministic init mimicking nn.Linear (uniform +/- 1/sqrt(fan_in)).
    Weights stored as (in_features, out_features) (transpose of PyTorch layout)."""
    bound = 1.0 / math.sqrt(n_input)
    keys = jax.random.split(key, 8)

    def u(k, shape):
        return jax.random.uniform(k, shape, jnp.float32, -bound, bound)

    wq = u(keys[0], (n_input, n_input)); bq = u(keys[1], (n_input,))
    wk = u(keys[2], (n_input, n_input)); bk = u(keys[3], (n_input,))
    wv = u(keys[4], (n_input, n_input)); bv = u(keys[5], (n_input,))
    wp = u(keys[6], (n_input, n_input)); bp = u(keys[7], (n_input,))
    return (wq, bq, wk, bk, wv, bv, wp, bp)


def _reference(x, params, n_heads):
    """Pure-JAX (f32) reference matching the PyTorch forward."""
    wq, bq, wk, bk, wv, bv, wp, bp = params
    S, D = x.shape
    d_k = D // n_heads

    def heads(y):  # (S, D) -> (H, S, d_k)
        return jnp.transpose(y.reshape(S, n_heads, d_k), (1, 0, 2))

    q, k, v = heads(x @ wq + bq), heads(x @ wk + bk), heads(x @ wv + bv)
    score = jnp.einsum('hqd,hkd->hqk', q, k) / math.sqrt(d_k)
    p = jax.nn.softmax(score, axis=-1)
    o = jnp.einsum('hqk,hkd->hqd', p, v)
    o = jnp.transpose(o, (1, 0, 2)).reshape(S, D)
    return o @ wp + bp, score


if __name__ == "__main__":
    SEQ, N_INPUT, N_HEADS = 8, 32, 4

    key = jax.random.PRNGKey(0)
    k_x, k_p = jax.random.split(key)
    x1d = jax.random.normal(k_x, (SEQ, N_INPUT), jnp.float32)
    params = _init_params(k_p, N_INPUT)
    prepared = prepare_params(params, N_HEADS)

    out, score = weight1d_mha_forward(x1d, prepared, N_HEADS)
    jax.block_until_ready((out, score))

    ref_out, ref_score = _reference(x1d, params, N_HEADS)
    assert out.shape == (SEQ, N_INPUT) and score.shape == (N_HEADS, SEQ, SEQ)
    # Matmul operands run in bf16 on the MXU (f32 accumulation); tolerances reflect
    # bf16 input rounding while the softmax / accumulation math stays f32-exact.
    assert jnp.allclose(score, ref_score, atol=5e-2, rtol=5e-2), "score mismatch"
    assert jnp.allclose(out, ref_out, atol=5e-2, rtol=5e-2), "output mismatch"

    # Attn2d-provided branch (concat of previous maps is glue outside the kernel).
    prev = jnp.zeros((2, SEQ, SEQ), jnp.float32)
    _, score_cat = weight1d_mha_forward(x1d, prepared, N_HEADS, attn2d=prev)
    jax.block_until_ready(score_cat)
    assert score_cat.shape == (2 + N_HEADS, SEQ, SEQ)

    print("KERNEL_OK")
</pallas_src>

<mosaic_0001>
module attributes {stable_mosaic.version = 11 : i64} {
  func.func @_qkv_kernel(%arg0: i32, %arg1: i32, %arg2: memref<8x32xbf16, #tpu.memory_space<vmem>>, %arg3: memref<1x32x8xbf16, #tpu.memory_space<vmem>>, %arg4: memref<1x1x8xf32, #tpu.memory_space<vmem>>, %arg5: memref<1x32x8xbf16, #tpu.memory_space<vmem>>, %arg6: memref<1x1x8xf32, #tpu.memory_space<vmem>>, %arg7: memref<1x32x8xbf16, #tpu.memory_space<vmem>>, %arg8: memref<1x1x8xf32, #tpu.memory_space<vmem>>, %arg9: memref<1x8x8xbf16, #tpu.memory_space<vmem>>, %arg10: memref<1x8x8xbf16, #tpu.memory_space<vmem>>, %arg11: memref<1x8x8xbf16, #tpu.memory_space<vmem>>) attributes {dimension_semantics = [#tpu.dimension_semantics<parallel>, #tpu.dimension_semantics<parallel>], iteration_bounds = array<i64: 1, 4>, scalar_prefetch = 0 : i64, scratch_operands = 0 : i64, tpu.core_type = #tpu.core_type<tc>, window_params = [{transform_indices = @transform_0, window_bounds = array<i64: 8, 32>}, {transform_indices = @transform_1, window_bounds = array<i64: 1, 32, 8>}, {transform_indices = @transform_2, window_bounds = array<i64: 1, 1, 8>}, {transform_indices = @transform_3, window_bounds = array<i64: 1, 32, 8>}, {transform_indices = @transform_4, window_bounds = array<i64: 1, 1, 8>}, {transform_indices = @transform_5, window_bounds = array<i64: 1, 32, 8>}, {transform_indices = @transform_6, window_bounds = array<i64: 1, 1, 8>}, {transform_indices = @transform_7, window_bounds = array<i64: 1, 8, 8>}, {transform_indices = @transform_8, window_bounds = array<i64: 1, 8, 8>}, {transform_indices = @transform_9, window_bounds = array<i64: 1, 8, 8>}]} {
    %c0 = arith.constant 0 : index
    %c0_0 = arith.constant 0 : index
    %0 = vector.load %arg2[%c0, %c0_0] : memref<8x32xbf16, #tpu.memory_space<vmem>>, vector<8x32xbf16>
    %c0_1 = arith.constant 0 : index
    %c0_2 = arith.constant 0 : index
    %c0_3 = arith.constant 0 : index
    %1 = vector.load %arg3[%c0_1, %c0_2, %c0_3] : memref<1x32x8xbf16, #tpu.memory_space<vmem>>, vector<1x32x8xbf16>
    %2 = vector.shape_cast %1 : vector<1x32x8xbf16> to vector<32x8xbf16>
    %cst = arith.constant dense<0.000000e+00> : vector<8x8xf32>
    %3 = tpu.matmul %0, %2, %cst {dimension_numbers = #tpu.dot_dimension_numbers<[1], [0], [0], [1], [0, 0, 1, 1], [], []>} : vector<8x32xbf16>, vector<32x8xbf16>, vector<8x8xf32> -> vector<8x8xf32>
    %c0_4 = arith.constant 0 : index
    %c0_5 = arith.constant 0 : index
    %c0_6 = arith.constant 0 : index
    %4 = vector.load %arg4[%c0_4, %c0_5, %c0_6] : memref<1x1x8xf32, #tpu.memory_space<vmem>>, vector<1x1x8xf32>
    %5 = vector.shape_cast %4 : vector<1x1x8xf32> to vector<1x8xf32>
    %6 = vector.broadcast %5 : vector<1x8xf32> to vector<8x8xf32>
    %7 = arith.addf %3, %6 : vector<8x8xf32>
    %cst_7 = arith.constant 0.353553385 : f32
    %8 = vector.broadcast %cst_7 : f32 to vector<8x8xf32>
    %9 = arith.mulf %7, %8 : vector<8x8xf32>
    %10 = arith.truncf %9 : vector<8x8xf32> to vector<8x8xbf16>
    %c0_8 = arith.constant 0 : index
    %c0_9 = arith.constant 0 : index
    %c0_10 = arith.constant 0 : index
    %11 = vector.load %arg9[%c0_8, %c0_9, %c0_10] : memref<1x8x8xbf16, #tpu.memory_space<vmem>>, vector<1x8x8xbf16>
    %12 = vector.shape_cast %11 : vector<1x8x8xbf16> to vector<8x8xbf16>
    %13 = vector.shape_cast %10 : vector<8x8xbf16> to vector<1x8x8xbf16>
    tpu.vector_store %arg9[%c0_8, %c0_9, %c0_10], %13 {strides = array<i32>} : memref<1x8x8xbf16, #tpu.memory_space<vmem>>, vector<1x8x8xbf16>,
    %c0_11 = arith.constant 0 : index
    %c0_12 = arith.constant 0 : index
    %c0_13 = arith.constant 0 : index
    %14 = vector.load %arg5[%c0_11, %c0_12, %c0_13] : memref<1x32x8xbf16, #tpu.memory_space<vmem>>, vector<1x32x8xbf16>
    %15 = vector.shape_cast %14 : vector<1x32x8xbf16> to vector<32x8xbf16>
    %cst_14 = arith.constant dense<0.000000e+00> : vector<8x8xf32>
    %16 = tpu.matmul %0, %15, %cst_14 {dimension_numbers = #tpu.dot_dimension_numbers<[1], [0], [0], [1], [0, 0, 1, 1], [], []>} : vector<8x32xbf16>, vector<32x8xbf16>, vector<8x8xf32> -> vector<8x8xf32>
    %c0_15 = arith.constant 0 : index
    %c0_16 = arith.constant 0 : index
    %c0_17 = arith.constant 0 : index
    %17 = vector.load %arg6[%c0_15, %c0_16, %c0_17] : memref<1x1x8xf32, #tpu.memory_space<vmem>>, vector<1x1x8xf32>
    %18 = vector.shape_cast %17 : vector<1x1x8xf32> to vector<1x8xf32>
    %19 = vector.broadcast %18 : vector<1x8xf32> to vector<8x8xf32>
    %20 = arith.addf %16, %19 : vector<8x8xf32>
    %21 = arith.truncf %20 : vector<8x8xf32> to vector<8x8xbf16>
    %c0_18 = arith.constant 0 : index
    %c0_19 = arith.constant 0 : index
    %c0_20 = arith.constant 0 : index
    %22 = vector.load %arg10[%c0_18, %c0_19, %c0_20] : memref<1x8x8xbf16, #tpu.memory_space<vmem>>, vector<1x8x8xbf16>
    %23 = vector.shape_cast %22 : vector<1x8x8xbf16> to vector<8x8xbf16>
    %24 = vector.shape_cast %21 : vector<8x8xbf16> to vector<1x8x8xbf16>
    tpu.vector_store %arg10[%c0_18, %c0_19, %c0_20], %24 {strides = array<i32>} : memref<1x8x8xbf16, #tpu.memory_space<vmem>>, vector<1x8x8xbf16>,
    %c0_21 = arith.constant 0 : index
    %c0_22 = arith.constant 0 : index
    %c0_23 = arith.constant 0 : index
    %25 = vector.load %arg7[%c0_21, %c0_22, %c0_23] : memref<1x32x8xbf16, #tpu.memory_space<vmem>>, vector<1x32x8xbf16>
    %26 = vector.shape_cast %25 : vector<1x32x8xbf16> to vector<32x8xbf16>
    %cst_24 = arith.constant dense<0.000000e+00> : vector<8x8xf32>
    %27 = tpu.matmul %0, %26, %cst_24 {dimension_numbers = #tpu.dot_dimension_numbers<[1], [0], [0], [1], [0, 0, 1, 1], [], []>} : vector<8x32xbf16>, vector<32x8xbf16>, vector<8x8xf32> -> vector<8x8xf32>
    %c0_25 = arith.constant 0 : index
    %c0_26 = arith.constant 0 : index
    %c0_27 = arith.constant 0 : index
    %28 = vector.load %arg8[%c0_25, %c0_26, %c0_27] : memref<1x1x8xf32, #tpu.memory_space<vmem>>, vector<1x1x8xf32>
    %29 = vector.shape_cast %28 : vector<1x1x8xf32> to vector<1x8xf32>
    %30 = vector.broadcast %29 : vector<1x8xf32> to vector<8x8xf32>
    %31 = arith.addf %27, %30 : vector<8x8xf32>
    %32 = arith.truncf %31 : vector<8x8xf32> to vector<8x8xbf16>
    %c0_28 = arith.constant 0 : index
    %c0_29 = arith.constant 0 : index
    %c0_30 = arith.constant 0 : index
    %33 = vector.load %arg11[%c0_28, %c0_29, %c0_30] : memref<1x8x8xbf16, #tpu.memory_space<vmem>>, vector<1x8x8xbf16>
    %34 = vector.shape_cast %33 : vector<1x8x8xbf16> to vector<8x8xbf16>
    %35 = vector.shape_cast %32 : vector<8x8xbf16> to vector<1x8x8xbf16>
    tpu.vector_store %arg11[%c0_28, %c0_29, %c0_30], %35 {strides = array<i32>} : memref<1x8x8xbf16, #tpu.memory_space<vmem>>, vector<1x8x8xbf16>,
    return
  }
  func.func @transform_0(%arg0: i32, %arg1: i32) -> (i32, i32) {
    %c0_i32 = arith.constant 0 : i32
    %c0_i32_0 = arith.constant 0 : i32
    return %arg0, %c0_i32 : i32, i32
  }
  func.func @transform_1(%arg0: i32, %arg1: i32) -> (i32, i32, i32) {
    %c0_i32 = arith.constant 0 : i32
    %c0_i32_0 = arith.constant 0 : i32
    %c0_i32_1 = arith.constant 0 : i32
    return %arg1, %c0_i32, %c0_i32_0 : i32, i32, i32
  }
  func.func @transform_2(%arg0: i32, %arg1: i32) -> (i32, i32, i32) {
    %c0_i32 = arith.constant 0 : i32
    %c0_i32_0 = arith.constant 0 : i32
    %c0_i32_1 = arith.constant 0 : i32
    return %arg1, %c0_i32, %c0_i32_0 : i32, i32, i32
  }
  func.func @transform_3(%arg0: i32, %arg1: i32) -> (i32, i32, i32) {
    %c0_i32 = arith.constant 0 : i32
    %c0_i32_0 = arith.constant 0 : i32
    %c0_i32_1 = arith.constant 0 : i32
    return %arg1, %c0_i32, %c0_i32_0 : i32, i32, i32
  }
  func.func @transform_4(%arg0: i32, %arg1: i32) -> (i32, i32, i32) {
    %c0_i32 = arith.constant 0 : i32
    %c0_i32_0 = arith.constant 0 : i32
    %c0_i32_1 = arith.constant 0 : i32
    return %arg1, %c0_i32, %c0_i32_0 : i32, i32, i32
  }
  func.func @transform_5(%arg0: i32, %arg1: i32) -> (i32, i32, i32) {
    %c0_i32 = arith.constant 0 : i32
    %c0_i32_0 = arith.constant 0 : i32
    %c0_i32_1 = arith.constant 0 : i32
    return %arg1, %c0_i32, %c0_i32_0 : i32, i32, i32
  }
  func.func @transform_6(%arg0: i32, %arg1: i32) -> (i32, i32, i32) {
    %c0_i32 = arith.constant 0 : i32
    %c0_i32_0 = arith.constant 0 : i32
    %c0_i32_1 = arith.constant 0 : i32
    return %arg1, %c0_i32, %c0_i32_0 : i32, i32, i32
  }
  func.func @transform_7(%arg0: i32, %arg1: i32) -> (i32, i32, i32) {
    %c0_i32 = arith.constant 0 : i32
    %c0_i32_0 = arith.constant 0 : i32
    return %arg1, %arg0, %c0_i32 : i32, i32, i32
  }
  func.func @transform_8(%arg0: i32, %arg1: i32) -> (i32, i32, i32) {
    %c0_i32 = arith.constant 0 : i32
    %c0_i32_0 = arith.constant 0 : i32
    return %arg1, %arg0, %c0_i32 : i32, i32, i32
  }
  func.func @transform_9(%arg0: i32, %arg1: i32) -> (i32, i32, i32) {
    %c0_i32 = arith.constant 0 : i32
    %c0_i32_0 = arith.constant 0 : i32
    return %arg1, %arg0, %c0_i32 : i32, i32, i32
  }
}

</mosaic_0001>

<llo_original>
// kernel: tpu_custom_call.1
$region0: #{tpu_custom_call.1}
  #allocation0 [shape = 'u32[]', space=smem, size = 0x4, offset = 0x4, fixed_abs, tag = 'smem constant byte address 0x4 - core index']
  #allocation1 [shape = 'u32[72,128]{1,0:T(1,128)}', space=vmem, size = 0x9000, scoped, tag = 'internal scratch']
  %s0 = inlined_call_operand.vmem [shape: bf16[8,32], index: 0, kind: input, shape index: {}]
  %s1 = inlined_call_operand.vmem [shape: bf16[4,32,8], index: 1, kind: input, shape index: {}]
  %s2 = inlined_call_operand.vmem [shape: f32[4,1,8], index: 2, kind: input, shape index: {}]
  %s3 = inlined_call_operand.vmem [shape: bf16[4,32,8], index: 3, kind: input, shape index: {}]
  %s4 = inlined_call_operand.vmem [shape: f32[4,1,8], index: 4, kind: input, shape index: {}]
  %s5 = inlined_call_operand.vmem [shape: bf16[4,32,8], index: 5, kind: input, shape index: {}]
  %s6 = inlined_call_operand.vmem [shape: f32[4,1,8], index: 6, kind: input, shape index: {}]
  %s7 = inlined_call_operand.hbm [shape: bf16[4,8,8], index: 7, kind: output, shape index: {0}]
  %s8 = inlined_call_operand.hbm [shape: bf16[4,8,8], index: 8, kind: output, shape index: {1}]
  %s9 = inlined_call_operand.hbm [shape: bf16[4,8,8], index: 9, kind: output, shape index: {2}]
  %10 = xla_tuple %s7, %s8, %s9
  %s11 = sld [smem:[#allocation0]]
  $region77: #{tpu_custom_call.1} parent=0
    _
  %s13 = ssub.s32 1, %s11
  %s14 = scalar_select 0, %s13, %s11
  $region1: #{tpu_custom_call.1} parent=0
    #allocation2 [shape = 'u8[4096]{0}', space=vmem, size = 0x1000, scoped, tag = 'output window, operand 0']
    #allocation3 [shape = 's32[2]{0}', space=sflag, size = 0x8, scoped, tag = 'scoped memory for tpu_custom_call.1']
    #allocation4 [shape = 'u8[4096]{0}', space=vmem, size = 0x1000, scoped, tag = 'output window, operand 1']
    #allocation5 [shape = 's32[2]{0}', space=sflag, size = 0x8, scoped, tag = 'scoped memory for tpu_custom_call.1']
    #allocation6 [shape = 'u8[4096]{0}', space=vmem, size = 0x1000, scoped, tag = 'output window, operand 2']
    %15 = vsyncpa [#allocation3], 0
    %s16 = scalar_lea.sflag [#allocation3], 1
    %17 = vsyncpa %s16, 0
    %18 = vsyncpa [#allocation5], 0
    %s19 = scalar_lea.sflag [#allocation5], 1
    %20 = vsyncpa %s19, 0
    loop: start=0, step=1, limit=6
    $region2: #{tpu_custom_call.1} parent=1 // loop_pre_header
      _
    $region3: #{tpu_custom_call.1} parent=1 // loop_header
      %s22 = sphi 0, %s26
      %p23 = scmp.ge.s32.totalorder %s22, 6
      %s29 = sphi 0, %s41
      %s30 = sphi 0, %s37
      %s31 = sphi 0, %s29
      %s32 = sphi 0, %s30
      %s33 = sphi 0, %s31
      %s34 = sphi 0, %s32
      %s44 = sphi 0, %s46
      %s47 = sphi 0, %s44
      %s48 = sphi 0, %s47
      %s64 = sphi 0, %s48
      %s70 = sphi 0, %s72
      %s73 = sphi 0, %s70
      %s74 = sphi 0, %s73
      %s90 = sphi 0, %s74
      %s96 = sphi 0, %s98
      %s99 = sphi 0, %s96
      %s100 = sphi 0, %s99
      %s116 = sphi 0, %s100
      %s122 = sphi 0, %s124
      %s125 = sphi 0, %s122
      %s126 = sphi 0, %s125
      %s142 = sphi 0, %s126
      %s148 = sphi 0, %s150
      %s151 = sphi 0, %s148
      %s152 = sphi 0, %s151
      %s168 = sphi 0, %s152
      %s174 = sphi 0, %s176
      %s177 = sphi 0, %s174
      %s178 = sphi 0, %s177
      %s194 = sphi 0, %s178
      %s200 = sphi 0, %s202
      %s203 = sphi 0, %s200
      %s204 = sphi 0, %s203
      %s220 = sphi 0, %s204
      %s228 = sphi 0, %s230
      %s231 = sphi 0, %s228
      %s232 = sphi 0, %s231
      %s248 = sphi 0, %s232
      %s256 = sphi 0, %s258
      %s259 = sphi 0, %s256
      %s260 = sphi 0, %s259
      %s276 = sphi 0, %s260
      %s284 = sphi 0, %s286
      %s287 = sphi 0, %s284
      %s288 = sphi 0, %s287
      %s304 = sphi 0, %s288
    $region4: #{tpu_custom_call.1} parent=1 // loop_header_branch
      %25 = sbr.rel (%p23) target = $region8
    $region5: #{tpu_custom_call.1} parent=1 // loop_body
      %s27 = ssub.s32 %s22, 1
      %s28 = ssub.s32 %s22, 2
      %s35 = sadd.s32 1, %s30
      %p36 = scmp.ge.s32.totalorder %s35, 4
      %s37 = scalar_select %p36, 0, %s35
      %s38 = sadd.s32 1, %s29
      %s39 = scalar_select %p36, %s38, %s29
      %p40 = scmp.ge.s32.totalorder %s39, 1
      %s41 = scalar_select %p40, 0, %s39
      %s42 = ssub.s32 %s29, %s41
      %p43 = scmp.eq.s32.totalorder %s42, 0
      %s45 = sadd.s32 %s44, 1
      %s46 = scalar_select %p43, %s44, %s45
      %p49 = pneg %p43
      %p50 = scmp.eq.s32.totalorder %s22, 3
      %p51 = por %p49, %p50
      %p52 = scmp.ne.s32.totalorder %s44, %s47
      %p53 = scmp.eq.s32.totalorder %s22, 0
      %p54 = por %p52, %p53
      %p55 = scmp.ne.s32.totalorder %s44, %s47
      %p56 = scmp.eq.s32.totalorder %s27, 3
      %p57 = por %p55, %p56
      %p58 = scmp.ne.s32.totalorder %s47, %s48
      %p59 = scmp.eq.s32.totalorder %s27, 0
      %p60 = por %p58, %p59
      %p61 = scmp.ne.s32.totalorder %s47, %s48
      %p62 = scmp.eq.s32.totalorder %s28, 3
      %p63 = por %p61, %p62
      %p65 = scmp.ne.s32.totalorder %s48, %s64
      %p66 = scmp.eq.s32.totalorder %s28, 0
      %p67 = por %p65, %p66
      %s68 = ssub.s32 %s30, %s37
      %p69 = scmp.eq.s32.totalorder %s68, 0
      %s71 = sadd.s32 %s70, 1
      %s72 = scalar_select %p69, %s70, %s71
      %p75 = pneg %p69
      %p76 = scmp.eq.s32.totalorder %s22, 3
      %p77 = por %p75, %p76
      %p78 = scmp.ne.s32.totalorder %s70, %s73
      %p79 = scmp.eq.s32.totalorder %s22, 0
      %p80 = por %p78, %p79
      %p81 = scmp.ne.s32.totalorder %s70, %s73
      %p82 = scmp.eq.s32.totalorder %s27, 3
      %p83 = por %p81, %p82
      %p84 = scmp.ne.s32.totalorder %s73, %s74
      %p85 = scmp.eq.s32.totalorder %s27, 0
      %p86 = por %p84, %p85
      %p87 = scmp.ne.s32.totalorder %s73, %s74
      %p88 = scmp.eq.s32.totalorder %s28, 3
      %p89 = por %p87, %p88
      %p91 = scmp.ne.s32.totalorder %s74, %s90
      %p92 = scmp.eq.s32.totalorder %s28, 0
      %p93 = por %p91, %p92
      %s94 = ssub.s32 %s30, %s37
      %p95 = scmp.eq.s32.totalorder %s94, 0
      %s97 = sadd.s32 %s96, 1
      %s98 = scalar_select %p95, %s96, %s97
      %p101 = pneg %p95
      %p102 = scmp.eq.s32.totalorder %s22, 3
      %p103 = por %p101, %p102
      %p104 = scmp.ne.s32.totalorder %s96, %s99
      %p105 = scmp.eq.s32.totalorder %s22, 0
      %p106 = por %p104, %p105
      %p107 = scmp.ne.s32.totalorder %s96, %s99
      %p108 = scmp.eq.s32.totalorder %s27, 3
      %p109 = por %p107, %p108
      %p110 = scmp.ne.s32.totalorder %s99, %s100
      %p111 = scmp.eq.s32.totalorder %s27, 0
      %p112 = por %p110, %p111
      %p113 = scmp.ne.s32.totalorder %s99, %s100
      %p114 = scmp.eq.s32.totalorder %s28, 3
      %p115 = por %p113, %p114
      %p117 = scmp.ne.s32.totalorder %s100, %s116
      %p118 = scmp.eq.s32.totalorder %s28, 0
      %p119 = por %p117, %p118
      %s120 = ssub.s32 %s30, %s37
      %p121 = scmp.eq.s32.totalorder %s120, 0
      %s123 = sadd.s32 %s122, 1
      %s124 = scalar_select %p121, %s122, %s123
      %p127 = pneg %p121
      %p128 = scmp.eq.s32.totalorder %s22, 3
      %p129 = por %p127, %p128
      %p130 = scmp.ne.s32.totalorder %s122, %s125
      %p131 = scmp.eq.s32.totalorder %s22, 0
      %p132 = por %p130, %p131
      %p133 = scmp.ne.s32.totalorder %s122, %s125
      %p134 = scmp.eq.s32.totalorder %s27, 3
      %p135 = por %p133, %p134
      %p136 = scmp.ne.s32.totalorder %s125, %s126
      %p137 = scmp.eq.s32.totalorder %s27, 0
      %p138 = por %p136, %p137
      %p139 = scmp.ne.s32.totalorder %s125, %s126
      %p140 = scmp.eq.s32.totalorder %s28, 3
      %p141 = por %p139, %p140
      %p143 = scmp.ne.s32.totalorder %s126, %s142
      %p144 = scmp.eq.s32.totalorder %s28, 0
      %p145 = por %p143, %p144
      %s146 = ssub.s32 %s30, %s37
      %p147 = scmp.eq.s32.totalorder %s146, 0
      %s149 = sadd.s32 %s148, 1
      %s150 = scalar_select %p147, %s148, %s149
      %p153 = pneg %p147
      %p154 = scmp.eq.s32.totalorder %s22, 3
      %p155 = por %p153, %p154
      %p156 = scmp.ne.s32.totalorder %s148, %s151
      %p157 = scmp.eq.s32.totalorder %s22, 0
      %p158 = por %p156, %p157
      %p159 = scmp.ne.s32.totalorder %s148, %s151
      %p160 = scmp.eq.s32.totalorder %s27, 3
      %p161 = por %p159, %p160
      %p162 = scmp.ne.s32.totalorder %s151, %s152
      %p163 = scmp.eq.s32.totalorder %s27, 0
      %p164 = por %p162, %p163
      %p165 = scmp.ne.s32.totalorder %s151, %s152
      %p166 = scmp.eq.s32.totalorder %s28, 3
      %p167 = por %p165, %p166
      %p169 = scmp.ne.s32.totalorder %s152, %s168
      %p170 = scmp.eq.s32.totalorder %s28, 0
      %p171 = por %p169, %p170
      %s172 = ssub.s32 %s30, %s37
      %p173 = scmp.eq.s32.totalorder %s172, 0
      %s175 = sadd.s32 %s174, 1
      %s176 = scalar_select %p173, %s174, %s175
      %p179 = pneg %p173
      %p180 = scmp.eq.s32.totalorder %s22, 3
      %p181 = por %p179, %p180
      %p182 = scmp.ne.s32.totalorder %s174, %s177
      %p183 = scmp.eq.s32.totalorder %s22, 0
      %p184 = por %p182, %p183
      %p185 = scmp.ne.s32.totalorder %s174, %s177
      %p186 = scmp.eq.s32.totalorder %s27, 3
      %p187 = por %p185, %p186
      %p188 = scmp.ne.s32.totalorder %s177, %s178
      %p189 = scmp.eq.s32.totalorder %s27, 0
      %p190 = por %p188, %p189
      %p191 = scmp.ne.s32.totalorder %s177, %s178
      %p192 = scmp.eq.s32.totalorder %s28, 3
      %p193 = por %p191, %p192
      %p195 = scmp.ne.s32.totalorder %s178, %s194
      %p196 = scmp.eq.s32.totalorder %s28, 0
      %p197 = por %p195, %p196
      %s198 = ssub.s32 %s30, %s37
      %p199 = scmp.eq.s32.totalorder %s198, 0
      %s201 = sadd.s32 %s200, 1
      %s202 = scalar_select %p199, %s200, %s201
      %p205 = pneg %p199
      %p206 = scmp.eq.s32.totalorder %s22, 3
      %p207 = por %p205, %p206
      %p208 = scmp.ne.s32.totalorder %s200, %s203
      %p209 = scmp.eq.s32.totalorder %s22, 0
      %p210 = por %p208, %p209
      %p211 = scmp.ne.s32.totalorder %s200, %s203
      %p212 = scmp.eq.s32.totalorder %s27, 3
      %p213 = por %p211, %p212
      %p214 = scmp.ne.s32.totalorder %s203, %s204
      %p215 = scmp.eq.s32.totalorder %s27, 0
      %p216 = por %p214, %p215
      %p217 = scmp.ne.s32.totalorder %s203, %s204
      %p218 = scmp.eq.s32.totalorder %s28, 3
      %p219 = por %p217, %p218
      %p221 = scmp.ne.s32.totalorder %s204, %s220
      %p222 = scmp.eq.s32.totalorder %s28, 0
      %p223 = por %p221, %p222
      %s224 = ssub.s32 %s30, %s37
      %s225 = ssub.s32 %s29, %s41
      %s226 = sor.u32 %s224, %s225
      %p227 = scmp.eq.s32.totalorder %s226, 0
      %s229 = sadd.s32 %s228, 1
      %s230 = scalar_select %p227, %s228, %s229
      %p233 = pneg %p227
      %p234 = scmp.eq.s32.totalorder %s22, 3
      %p235 = por %p233, %p234
      %p236 = scmp.ne.s32.totalorder %s228, %s231
      %p237 = scmp.eq.s32.totalorder %s22, 0
      %p238 = por %p236, %p237
      %p239 = scmp.ne.s32.totalorder %s228, %s231
      %p240 = scmp.eq.s32.totalorder %s27, 3
      %p241 = por %p239, %p240
      %p242 = scmp.ne.s32.totalorder %s231, %s232
      %p243 = scmp.eq.s32.totalorder %s27, 0
      %p244 = por %p242, %p243
      %p245 = scmp.ne.s32.totalorder %s231, %s232
      %p246 = scmp.eq.s32.totalorder %s28, 3
      %p247 = por %p245, %p246
      %p249 = scmp.ne.s32.totalorder %s232, %s248
      %p250 = scmp.eq.s32.totalorder %s28, 0
      %p251 = por %p249, %p250
      %s252 = ssub.s32 %s30, %s37
      %s253 = ssub.s32 %s29, %s41
      %s254 = sor.u32 %s252, %s253
      %p255 = scmp.eq.s32.totalorder %s254, 0
      %s257 = sadd.s32 %s256, 1
      %s258 = scalar_select %p255, %s256, %s257
      %p261 = pneg %p255
      %p262 = scmp.eq.s32.totalorder %s22, 3
      %p263 = por %p261, %p262
      %p264 = scmp.ne.s32.totalorder %s256, %s259
      %p265 = scmp.eq.s32.totalorder %s22, 0
      %p266 = por %p264, %p265
      %p267 = scmp.ne.s32.totalorder %s256, %s259
      %p268 = scmp.eq.s32.totalorder %s27, 3
      %p269 = por %p267, %p268
      %p270 = scmp.ne.s32.totalorder %s259, %s260
      %p271 = scmp.eq.s32.totalorder %s27, 0
      %p272 = por %p270, %p271
      %p273 = scmp.ne.s32.totalorder %s259, %s260
      %p274 = scmp.eq.s32.totalorder %s28, 3
      %p275 = por %p273, %p274
      %p277 = scmp.ne.s32.totalorder %s260, %s276
      %p278 = scmp.eq.s32.totalorder %s28, 0
      %p279 = por %p277, %p278
      %s280 = ssub.s32 %s30, %s37
      %s281 = ssub.s32 %s29, %s41
      %s282 = sor.u32 %s280, %s281
      %p283 = scmp.eq.s32.totalorder %s282, 0
      %s285 = sadd.s32 %s284, 1
      %s286 = scalar_select %p283, %s284, %s285
      %p289 = pneg %p283
      %p290 = scmp.eq.s32.totalorder %s22, 3
      %p291 = por %p289, %p290
      %p292 = scmp.ne.s32.totalorder %s284, %s287
      %p293 = scmp.eq.s32.totalorder %s22, 0
      %p294 = por %p292, %p293
      %p295 = scmp.ne.s32.totalorder %s284, %s287
      %p296 = scmp.eq.s32.totalorder %s27, 3
      %p297 = por %p295, %p296
      %p298 = scmp.ne.s32.totalorder %s287, %s288
      %p299 = scmp.eq.s32.totalorder %s27, 0
      %p300 = por %p298, %p299
      %p301 = scmp.ne.s32.totalorder %s287, %s288
      %p302 = scmp.eq.s32.totalorder %s28, 3
      %p303 = por %p301, %p302
      %p305 = scmp.ne.s32.totalorder %s288, %s304
      %p306 = scmp.eq.s32.totalorder %s28, 0
      %p307 = por %p305, %p306
      %p308 = scmp.le.s32.totalorder 1, %s22
      %p309 = scmp.lt.s32.totalorder %s22, 5
      %p310 = pnand %p308, %p309
      %p311 = pneg %p310
      // Predicated region
      $region9: #{tpu_custom_call.1} parent=5 // pred_check
        _
      $region10: #{tpu_custom_call.1} parent=5 // pred_check_branch
        %313 = sbr.rel (%p310) target = $region12
      $region11: #{tpu_custom_call.1} parent=5 // pred_region
        %s314 = ssub.s32 %s22, 1
        // Predicated region
        $region13: #{tpu_custom_call.1} parent=11 // pred_check
          %p315 = pneg %p60
        $region14: #{tpu_custom_call.1} parent=11 // pred_check_branch
          %317 = sbr.rel (%p315) target = $region16
        $region15: #{tpu_custom_call.1} parent=11 // pred_region
          %p318 = scmp.lt.s32.totalorder %s31, 0
          %s319 = scalar_select %p318, %s31, 0
          %s320 = smul.addr %s319, 4
          %s321 = scalar_lea.vmem %s0, %s320
        $region16: #{tpu_custom_call.1} parent=11 // pred_fallthru
          _
      $region12: #{tpu_custom_call.1} parent=5 // pred_fallthru
        _
      %p322 = scmp.lt.s32.totalorder %s22, 4
      // Predicated region
      $region17: #{tpu_custom_call.1} parent=5 // pred_check
        %p323 = pneg %p322
      $region18: #{tpu_custom_call.1} parent=5 // pred_check_branch
        %325 = sbr.rel (%p323) target = $region20
      $region19: #{tpu_custom_call.1} parent=5 // pred_region
        // Predicated region
        $region21: #{tpu_custom_call.1} parent=19 // pred_check
          %p326 = pneg %p80
        $region22: #{tpu_custom_call.1} parent=19 // pred_check_branch
          %328 = sbr.rel (%p326) target = $region24
        $region23: #{tpu_custom_call.1} parent=19 // pred_region
          %p329 = scmp.lt.s32.totalorder %s30, 3
          %s330 = scalar_select %p329, %s30, 3
          %s331 = smul.addr %s330, 4
          %s332 = smul.addr %s331, 4
          %s333 = scalar_lea.vmem %s1, %s332
        $region24: #{tpu_custom_call.1} parent=19 // pred_fallthru
          _
        // Predicated region
        $region25: #{tpu_custom_call.1} parent=19 // pred_check
          %p334 = pneg %p106
        $region26: #{tpu_custom_call.1} parent=19 // pred_check_branch
          %336 = sbr.rel (%p334) target = $region28
        $region27: #{tpu_custom_call.1} parent=19 // pred_region
          %p337 = scmp.lt.s32.totalorder %s30, 3
          %s338 = scalar_select %p337, %s30, 3
          %s339 = scalar_lea.vmem %s2, %s338
        $region28: #{tpu_custom_call.1} parent=19 // pred_fallthru
          _
        // Predicated region
        $region29: #{tpu_custom_call.1} parent=19 // pred_check
          %p340 = pneg %p132
        $region30: #{tpu_custom_call.1} parent=19 // pred_check_branch
          %342 = sbr.rel (%p340) target = $region32
        $region31: #{tpu_custom_call.1} parent=19 // pred_region
          %p343 = scmp.lt.s32.totalorder %s30, 3
          %s344 = scalar_select %p343, %s30, 3
          %s345 = smul.addr %s344, 4
          %s346 = smul.addr %s345, 4
          %s347 = scalar_lea.vmem %s3, %s346
        $region32: #{tpu_custom_call.1} parent=19 // pred_fallthru
          _
        // Predicated region
        $region33: #{tpu_custom_call.1} parent=19 // pred_check
          %p348 = pneg %p158
        $region34: #{tpu_custom_call.1} parent=19 // pred_check_branch
          %350 = sbr.rel (%p348) target = $region36
        $region35: #{tpu_custom_call.1} parent=19 // pred_region
          %p351 = scmp.lt.s32.totalorder %s30, 3
          %s352 = scalar_select %p351, %s30, 3
          %s353 = scalar_lea.vmem %s4, %s352
        $region36: #{tpu_custom_call.1} parent=19 // pred_fallthru
          _
        // Predicated region
        $region37: #{tpu_custom_call.1} parent=19 // pred_check
          %p354 = pneg %p184
        $region38: #{tpu_custom_call.1} parent=19 // pred_check_branch
          %356 = sbr.rel (%p354) target = $region40
        $region39: #{tpu_custom_call.1} parent=19 // pred_region
          %p357 = scmp.lt.s32.totalorder %s30, 3
          %s358 = scalar_select %p357, %s30, 3
          %s359 = smul.addr %s358, 4
          %s360 = smul.addr %s359, 4
          %s361 = scalar_lea.vmem %s5, %s360
        $region40: #{tpu_custom_call.1} parent=19 // pred_fallthru
          _
        // Predicated region
        $region41: #{tpu_custom_call.1} parent=19 // pred_check
          %p362 = pneg %p210
        $region42: #{tpu_custom_call.1} parent=19 // pred_check_branch
          %364 = sbr.rel (%p362) target = $region44
        $region43: #{tpu_custom_call.1} parent=19 // pred_region
          %p365 = scmp.lt.s32.totalorder %s30, 3
          %s366 = scalar_select %p365, %s30, 3
          %s367 = scalar_lea.vmem %s6, %s366
        $region44: #{tpu_custom_call.1} parent=19 // pred_fallthru
          _
      $region20: #{tpu_custom_call.1} parent=5 // pred_fallthru
        _
      %p368 = scmp.le.s32.totalorder 1, %s22
      %p369 = scmp.lt.s32.totalorder %s22, 5
      %p370 = pnand %p368, %p369
      %p371 = pneg %p370
      // Predicated region
      $region45: #{tpu_custom_call.1} parent=5 // pred_check
        _
      $region46: #{tpu_custom_call.1} parent=5 // pred_check_branch
        %373 = sbr.rel (%p370) target = $region48
      $region47: #{tpu_custom_call.1} parent=5 // pred_region
        %s374 = ssub.s32 %s22, 1
        %p375 = scmp.lt.s32.totalorder %s31, 0
        %s376 = scalar_select %p375, %s31, 0
        %s377 = smul.addr %s376, 4
        %s378 = scalar_lea.vmem %s0, %s377
        %p379 = pneg %p60
        %p380 = pneg %p57
        %p381 = scmp.lt.s32.totalorder %s32, 3
        %s382 = scalar_select %p381, %s32, 3
        %s383 = smul.addr %s382, 4
        %s384 = smul.addr %s383, 4
        %s385 = scalar_lea.vmem %s1, %s384
        %p386 = pneg %p86
        %p387 = pneg %p83
        %p388 = scmp.lt.s32.totalorder %s32, 3
        %s389 = scalar_select %p388, %s32, 3
        %s390 = scalar_lea.vmem %s2, %s389
        %p391 = pneg %p112
        %p392 = pneg %p109
        %p393 = scmp.lt.s32.totalorder %s32, 3
        %s394 = scalar_select %p393, %s32, 3
        %s395 = smul.addr %s394, 4
        %s396 = smul.addr %s395, 4
        %s397 = scalar_lea.vmem %s3, %s396
        %p398 = pneg %p138
        %p399 = pneg %p135
        %p400 = scmp.lt.s32.totalorder %s32, 3
        %s401 = scalar_select %p400, %s32, 3
        %s402 = scalar_lea.vmem %s4, %s401
        %p403 = pneg %p164
        %p404 = pneg %p161
        %p405 = scmp.lt.s32.totalorder %s32, 3
        %s406 = scalar_select %p405, %s32, 3
        %s407 = smul.addr %s406, 4
        %s408 = smul.addr %s407, 4
        %s409 = scalar_lea.vmem %s5, %s408
        %p410 = pneg %p190
        %p411 = pneg %p187
        %p412 = scmp.lt.s32.totalorder %s32, 3
        %s413 = scalar_select %p412, %s32, 3
        %s414 = scalar_lea.vmem %s6, %s413
        %p415 = pneg %p216
        %p416 = pneg %p213
        %p417 = pneg %p244
        %p418 = pneg %p241
        %s419 = sand.u32 %s231, 1
        %s420 = scalar_lea.sflag [#allocation3], %s419
        %s421 = sand.u32 %s231, 1
        %s422 = smul.addr %s421, 4
        %s423 = scalar_lea.vmem [#allocation2], %s422
        %p424 = pneg %p272
        %p425 = pneg %p269
        %s426 = sand.u32 %s27, 1
        %s427 = scalar_lea.sflag [#allocation5], %s426
        %s428 = sand.u32 %s259, 1
        %s429 = smul.addr %s428, 4
        %s430 = scalar_lea.vmem [#allocation4], %s429
        %p431 = pneg %p300
        %p432 = pneg %p297
        %s433 = sand.u32 %s27, 1
        %s434 = scalar_lea.sflag [#allocation5], %s433
        %s435 = sand.u32 %s287, 1
        %s436 = smul.addr %s435, 4
        %s437 = scalar_lea.vmem [#allocation6], %s436
        %p438 = scmp.lt.s32.totalorder %s31, 0
        %s439 = scalar_select %p438, %s31, 0
        %s440 = smul.addr %s439, 4
        %s441 = scalar_lea.vmem %s0, %s440
        %p442 = scmp.lt.s32.totalorder %s32, 3
        %s443 = scalar_select %p442, %s32, 3
        %s444 = smul.addr %s443, 4
        %s445 = smul.addr %s444, 4
        %s446 = scalar_lea.vmem %s1, %s445
        %p447 = scmp.lt.s32.totalorder %s32, 3
        %s448 = scalar_select %p447, %s32, 3
        %s449 = scalar_lea.vmem %s2, %s448
        %p450 = scmp.lt.s32.totalorder %s32, 3
        %s451 = scalar_select %p450, %s32, 3
        %s452 = smul.addr %s451, 4
        %s453 = smul.addr %s452, 4
        %s454 = scalar_lea.vmem %s3, %s453
        %p455 = scmp.lt.s32.totalorder %s32, 3
        %s456 = scalar_select %p455, %s32, 3
        %s457 = scalar_lea.vmem %s4, %s456
        %p458 = scmp.lt.s32.totalorder %s32, 3
        %s459 = scalar_select %p458, %s32, 3
        %s460 = smul.addr %s459, 4
        %s461 = smul.addr %s460, 4
        %s462 = scalar_lea.vmem %s5, %s461
        %p463 = scmp.lt.s32.totalorder %s32, 3
        %s464 = scalar_select %p463, %s32, 3
        %s465 = scalar_lea.vmem %s6, %s464
        %v467 = vld [vmem:[%s441] sm:$0xf]
        %v468 = vld [vmem:[%s446] sm:$0xf]
        %v469 = vld [vmem:[%s446 + $0x4] sm:$0xf]
        %v470 = vld [vmem:[%s446 + $0x8] sm:$0xf]
        %v471 = vld [vmem:[%s446 + $0xc] sm:$0xf]
        %v472 = vld [vmem:[%s449] sm:$0x1]
        %v474 = vperm.slane %v472, 0
        %v480 = vunpack.c.l.b16 %v468
        %v481 = vunpack.c.l.b16 %v469
        %v482 = vunpack.c.l.b16 %v470
        %v483 = vunpack.c.l.b16 %v471
        %v484 = vpack.c.b16 %v481, %v480
        %v485 = vpack.c.b16 %v483, %v482
        %vm488 = vcmask 261120
        %v490 = vsel %vm488, %v467, 0
        %492 = vmatpush.bf16.msra.mxu0 0
        %493 = vmatpush.bf16.msra.mxu0 0
        %494 = vmatpush.bf16.msra.mxu0 0
        %495 = vmatpush.bf16.msra.mxu0 0
        %496 = vmatpush.bf16.msra.mxu0 0
        %497 = vmatpush.bf16.msra.mxu0 0
        %498 = vmatpush.bf16.msra.mxu0 %v485
        %499 = vmatpush.bf16.msra.mxu0 %v484
        %500 = vmatmul.bf16.gmra.mxu0 %v490
        %v501 = vpop.f32.mrf.mxu0
        %v502 = vadd.f32 %v474, %v501
        %v503 = vpop.f32.mrf.mxu0
        %504 = vdwg.mxu0
        %v505 = vmul.f32 %v502, 0.35355338
        %v506 = vpack.c.bf16 %v505, %v505
        %vm507 = vcmask 60416
        %508 = vst.msk [vmem:[%s423] sm:$0xf] %vm507, %v506
        %v509 = vld [vmem:[%s454] sm:$0xf]
        %v510 = vld [vmem:[%s454 + $0x4] sm:$0xf]
        %v511 = vld [vmem:[%s454 + $0x8] sm:$0xf]
        %v512 = vld [vmem:[%s454 + $0xc] sm:$0xf]
        %v513 = vld [vmem:[%s457] sm:$0x1]
        %v515 = vperm.slane %v513, 0
        %v521 = vunpack.c.l.b16 %v509
        %v522 = vunpack.c.l.b16 %v510
        %v523 = vunpack.c.l.b16 %v511
        %v524 = vunpack.c.l.b16 %v512
        %v525 = vpack.c.b16 %v522, %v521
        %v526 = vpack.c.b16 %v524, %v523
        %529 = vmatpush.bf16.msra.mxu0 0
        %530 = vmatpush.bf16.msra.mxu0 0
        %531 = vmatpush.bf16.msra.mxu0 0
        %532 = vmatpush.bf16.msra.mxu0 0
        %533 = vmatpush.bf16.msra.mxu0 0
        %534 = vmatpush.bf16.msra.mxu0 0
        %535 = vmatpush.bf16.msra.mxu0 %v526
        %536 = vmatpush.bf16.msra.mxu0 %v525
        %537 = vmatmul.bf16.gmra.mxu0 %v490
        %v538 = vpop.f32.mrf.mxu0
        %v539 = vadd.f32 %v515, %v538
        %v540 = vpop.f32.mrf.mxu0
        %541 = vdwg.mxu0
        %v542 = vpack.c.bf16 %v539, %v539
        %543 = vst.msk [vmem:[%s430] sm:$0xf] %vm507, %v542
        %v544 = vld [vmem:[%s462] sm:$0xf]
        %v545 = vld [vmem:[%s462 + $0x4] sm:$0xf]
        %v546 = vld [vmem:[%s462 + $0x8] sm:$0xf]
        %v547 = vld [vmem:[%s462 + $0xc] sm:$0xf]
        %v548 = vld [vmem:[%s465] sm:$0x1]
        %v550 = vperm.slane %v548, 0
        %v556 = vunpack.c.l.b16 %v544
        %v557 = vunpack.c.l.b16 %v545
        %v558 = vunpack.c.l.b16 %v546
        %v559 = vunpack.c.l.b16 %v547
        %v560 = vpack.c.b16 %v557, %v556
        %v561 = vpack.c.b16 %v559, %v558
        %564 = vmatpush.bf16.msra.mxu0 0
        %565 = vmatpush.bf16.msra.mxu0 0
        %566 = vmatpush.bf16.msra.mxu0 0
        %567 = vmatpush.bf16.msra.mxu0 0
        %568 = vmatpush.bf16.msra.mxu0 0
        %569 = vmatpush.bf16.msra.mxu0 0
        %570 = vmatpush.bf16.msra.mxu0 %v561
        %571 = vmatpush.bf16.msra.mxu0 %v560
        %572 = vmatmul.bf16.gmra.mxu0 %v490
        %v573 = vpop.f32.mrf.mxu0
        %v574 = vadd.f32 %v550, %v573
        %v575 = vpop.f32.mrf.mxu0
        %576 = vdwg.mxu0
        %v577 = vpack.c.bf16 %v574, %v574
        %578 = vst.msk [vmem:[%s437] sm:$0xf] %vm507, %v577
        %s579 = sand.u32 %s231, 1
        %s580 = scalar_lea.sflag [#allocation3], %s579
        %s581 = sand.u32 %s231, 1
        %s582 = smul.addr %s581, 4
        %s583 = scalar_lea.vmem [#allocation2], %s582
        %s584 = sand.u32 %s27, 1
        %s585 = scalar_lea.sflag [#allocation5], %s584
        %s586 = sand.u32 %s259, 1
        %s587 = smul.addr %s586, 4
        %s588 = scalar_lea.vmem [#allocation4], %s587
        %s589 = sand.u32 %s27, 1
        %s590 = scalar_lea.sflag [#allocation5], %s589
        %s591 = sand.u32 %s287, 1
        %s592 = smul.addr %s591, 4
        %s593 = scalar_lea.vmem [#allocation6], %s592
        // Predicated region
        $region49: #{tpu_custom_call.1} parent=47 // pred_check
          %p594 = pneg %p241
        $region50: #{tpu_custom_call.1} parent=47 // pred_check_branch
          %596 = sbr.rel (%p594) target = $region52
        $region51: #{tpu_custom_call.1} parent=47 // pred_region
          %598 = vsyncadd %s580, 0
          %s599 = sadd.s32 %s31, %s32
          %s600 = smul.addr %s599, 4
          %s601 = scalar_lea.hbm %s7, %s600
          %s603 = sshll.u32 %s583, 4
          %s604 = int_to_ptr.vmem [resolvable:$true] %s603
          %s605 = sshll.u32 %s601, 4
          %s606 = int_to_ptr.hbm [resolvable:$true] %s605
          %608 = dma.vmem_to_hbm [thread:$0]  %s604, 64, %s606, %s580
        $region52: #{tpu_custom_call.1} parent=47 // pred_fallthru
          _
        // Predicated region
        $region53: #{tpu_custom_call.1} parent=47 // pred_check
          %p609 = pneg %p269
        $region54: #{tpu_custom_call.1} parent=47 // pred_check_branch
          %611 = sbr.rel (%p609) target = $region56
        $region55: #{tpu_custom_call.1} parent=47 // pred_region
          %613 = vsyncadd %s585, 0
          %s614 = sadd.s32 %s31, %s32
          %s615 = smul.addr %s614, 4
          %s616 = scalar_lea.hbm %s8, %s615
          %s618 = sshll.u32 %s588, 4
          %s619 = int_to_ptr.vmem [resolvable:$true] %s618
          %s620 = sshll.u32 %s616, 4
          %s621 = int_to_ptr.hbm [resolvable:$true] %s620
          %623 = dma.vmem_to_hbm [thread:$0]  %s619, 64, %s621, %s585
        $region56: #{tpu_custom_call.1} parent=47 // pred_fallthru
          _
        // Predicated region
        $region57: #{tpu_custom_call.1} parent=47 // pred_check
          %p624 = pneg %p297
        $region58: #{tpu_custom_call.1} parent=47 // pred_check_branch
          %626 = sbr.rel (%p624) target = $region60
        $region59: #{tpu_custom_call.1} parent=47 // pred_region
          %628 = vsyncadd %s590, 0
          %s629 = sadd.s32 %s31, %s32
          %s630 = smul.addr %s629, 4
          %s631 = scalar_lea.hbm %s9, %s630
          %s633 = sshll.u32 %s593, 4
          %s634 = int_to_ptr.vmem [resolvable:$true] %s633
          %s635 = sshll.u32 %s631, 4
          %s636 = int_to_ptr.hbm [resolvable:$true] %s635
          %638 = dma.vmem_to_hbm [thread:$0]  %s634, 64, %s636, %s590
        $region60: #{tpu_custom_call.1} parent=47 // pred_fallthru
          _
      $region48: #{tpu_custom_call.1} parent=5 // pred_fallthru
        _
      %p639 = scmp.le.s32.totalorder 2, %s22
      // Predicated region
      $region61: #{tpu_custom_call.1} parent=5 // pred_check
        %p640 = pneg %p639
      $region62: #{tpu_custom_call.1} parent=5 // pred_check_branch
        %642 = sbr.rel (%p640) target = $region64
      $region63: #{tpu_custom_call.1} parent=5 // pred_region
        %s643 = ssub.s32 %s22, 2
        // Predicated region
        $region65: #{tpu_custom_call.1} parent=63 // pred_check
          %p644 = pneg %p247
        $region66: #{tpu_custom_call.1} parent=63 // pred_check_branch
          %646 = sbr.rel (%p644) target = $region68
        $region67: #{tpu_custom_call.1} parent=63 // pred_region
          %s647 = sand.u32 %s232, 1
          %s648 = scalar_lea.sflag [#allocation3], %s647
          %s649 = sand.u32 %s232, 1
          %s650 = smul.addr %s649, 4
          %s651 = scalar_lea.vmem [#allocation2], %s650
          %653 = dma.done %s648, 64
        $region68: #{tpu_custom_call.1} parent=63 // pred_fallthru
          _
        // Predicated region
        $region69: #{tpu_custom_call.1} parent=63 // pred_check
          %p654 = pneg %p275
        $region70: #{tpu_custom_call.1} parent=63 // pred_check_branch
          %656 = sbr.rel (%p654) target = $region72
        $region71: #{tpu_custom_call.1} parent=63 // pred_region
          %s657 = sand.u32 %s28, 1
          %s658 = scalar_lea.sflag [#allocation5], %s657
          %s659 = sand.u32 %s260, 1
          %s660 = smul.addr %s659, 4
          %s661 = scalar_lea.vmem [#allocation4], %s660
          %663 = dma.done %s658, 64
        $region72: #{tpu_custom_call.1} parent=63 // pred_fallthru
          _
        // Predicated region
        $region73: #{tpu_custom_call.1} parent=63 // pred_check
          %p664 = pneg %p303
        $region74: #{tpu_custom_call.1} parent=63 // pred_check_branch
          %666 = sbr.rel (%p664) target = $region76
        $region75: #{tpu_custom_call.1} parent=63 // pred_region
          %s667 = sand.u32 %s28, 1
          %s668 = scalar_lea.sflag [#allocation5], %s667
          %s669 = sand.u32 %s288, 1
          %s670 = smul.addr %s669, 4
          %s671 = scalar_lea.vmem [#allocation6], %s670
          %673 = dma.done %s668, 64
        $region76: #{tpu_custom_call.1} parent=63 // pred_fallthru
          _
      $region64: #{tpu_custom_call.1} parent=5 // pred_fallthru
        _
    $region6: #{tpu_custom_call.1} parent=1 // loop_footer
      %s26 = sadd.s32 1, %s22
    $region7: #{tpu_custom_call.1} parent=1 // loop_footer_branch
      %21 = sbr.rel target = $region3
    $region8: #{tpu_custom_call.1} parent=1 // loop_exit
      _
    %674 = vsyncpa [#allocation3], 1
    %s675 = scalar_lea.sflag [#allocation3], 1
    %676 = vsyncpa %s675, 1
    %677 = vsyncpa [#allocation5], 1
    %s678 = scalar_lea.sflag [#allocation5], 1
    %679 = vsyncpa %s678, 1

</llo_original>
